<compile_context>
chip_gen: v6e
topology: v6e:2x2x1
jax: 0.10.0
libtpu: 0.0.40
codegen_flags: <defaults>
</compile_context>

<pallas_src>
import jax
import jax.numpy as jnp
from jax.experimental import pallas as pl
from jax.experimental.pallas import tpu as pltpu

_SUBLANE = 8  # f32 sublane width


def _cdiv(a, b):
    return -(-a // b)


def _round_up(n, m):
    return _cdiv(n, m) * m


def _softplus(h):
    # Numerically stable softplus: max(h, 0) + log1p(exp(-|h|)); matches
    # jax.nn.softplus.
    return jnp.maximum(h, 0.0) + jnp.log1p(jnp.exp(-jnp.abs(h)))


def _eval_two_layer(t, x_ref, w0x_ref, w0t_ref, b0_ref,
                    w1x_ref, w1t_ref, b1_ref, o_ref):
    """Fused 2-layer ConcatLinear MLP on one batch tile: (TB,Din)->(TB,H)->(TB,Dout)."""
    # Hoisted fused biases (f32): one (1, D) broadcast add per layer.
    tb0 = t * w0t_ref[...] + b0_ref[...]
    tb1 = t * w1t_ref[...] + b1_ref[...]

    w0 = w0x_ref[...]
    w1 = w1x_ref[...]

    # Cast the streamed activations to the weight compute dtype *inside* the
    # kernel (no extra HBM traffic); accumulate in f32 on the MXU.
    x = x_ref[...].astype(w0.dtype)
    h = jnp.dot(x, w0, preferred_element_type=jnp.float32)
    h = _softplus(h + tb0)                                   # f32 elementwise

    y = jnp.dot(h.astype(w1.dtype), w1,
                preferred_element_type=jnp.float32) + tb1    # last layer: no act
    o_ref[...] = y.astype(o_ref.dtype)


def _odefunc_kernel(t_ref, x_ref, w0x_ref, w0t_ref, b0_ref,
                    w1x_ref, w1t_ref, b1_ref, o_ref):
    _eval_two_layer(t_ref[0], x_ref, w0x_ref, w0t_ref, b0_ref,
                    w1x_ref, w1t_ref, b1_ref, o_ref)


def _odefunc_multi_kernel(ts_ref, x_ref, w0x_ref, w0t_ref, b0_ref,
                          w1x_ref, w1t_ref, b1_ref, o_ref):
    t = ts_ref[pl.program_id(0)]                             # per-stage t (SMEM)
    _eval_two_layer(t, x_ref, w0x_ref, w0t_ref, b0_ref,
                    w1x_ref, w1t_ref, b1_ref, o_ref)


def _pick_batch_tile(batch, tb_max):
    """Large tiles (amortize ~0.35us/step), but >=2 steps when batch allows so
    the 'parallel' batch axis can shard across both v7x TensorCores."""
    tb = max(_SUBLANE, _round_up(_cdiv(batch, 2), _SUBLANE))
    return min(tb_max, tb)


def _vmem_limit_bytes(tb, din, hid, dout, w_itemsize):
    """Generous estimate of the kernel's VMEM footprint (keeps headroom under
    v7x's 64 MiB instead of blindly reserving 48 MiB)."""
    stream = 2 * tb * din * 4 + 2 * tb * dout * 4            # double-buffered x / out
    weights = 2 * (din * hid + hid * dout) * w_itemsize      # resident matmul weights
    biases = 2 * 3 * (hid + dout) * 4                        # wt / b (f32)
    scratch = tb * hid * 4 + tb * dout * 4                   # intermediates
    est = stream + weights + biases + scratch
    return int(min(32 * 2**20, max(8 * 2**20, 4 * est)))


def _weight_args(params, compute_dtype):
    (w0x, w0t, b0), (w1x, w1t, b1) = params
    # Only the big matmul weights go to compute_dtype; time-columns and biases
    # stay f32 (they feed the f32 bias-add path).
    return (w0x.astype(compute_dtype), w0t, b0,
            w1x.astype(compute_dtype), w1t, b1)


def _weight_specs(din, hid, dout, index_map):
    return [
        pl.BlockSpec((din, hid), index_map),   # w0x (resident, DMA'd once)
        pl.BlockSpec((1, hid), index_map),     # w0t
        pl.BlockSpec((1, hid), index_map),     # b0
        pl.BlockSpec((hid, dout), index_map),  # w1x (resident, DMA'd once)
        pl.BlockSpec((1, dout), index_map),    # w1t
        pl.BlockSpec((1, dout), index_map),    # b1
    ]


def odefunc_forward(t, x, params, *, tb_max=2048, compute_dtype=jnp.float32):
    """Pallas implementation of ODEfunc.forward(t, states).

    params = ((w0x, w0t, b0), (w1x, w1t, b1)) with
      w*x: (Din, Dout), w*t: (1, Dout), b*: (1, Dout)
    """
    (w0x, _, _), (w1x, _, _) = params
    batch, din = x.shape
    hid = w0x.shape[1]
    dout = w1x.shape[1]

    tb = _pick_batch_tile(batch, tb_max)
    grid = (_cdiv(batch, tb),)                 # ragged last block: masked writes
    const = lambda i: (0, 0)                   # weights never change block -> no re-DMA

    t_arr = jnp.reshape(jnp.asarray(t, jnp.float32), (1,))
    w_args = _weight_args(params, compute_dtype)

    out = pl.pallas_call(
        _odefunc_kernel,
        out_shape=jax.ShapeDtypeStruct((batch, dout), jnp.float32),
        grid=grid,
        in_specs=[
            pl.BlockSpec(memory_space=pltpu.MemorySpace.SMEM),   # t scalar
            pl.BlockSpec((tb, din), lambda i: (i, 0)),           # x batch tile (unpadded)
        ] + _weight_specs(din, hid, dout, const),
        out_specs=pl.BlockSpec((tb, dout), lambda i: (i, 0)),    # unpadded output
        compiler_params=pltpu.CompilerParams(
            dimension_semantics=("parallel",),                   # megacore on v7x
            vmem_limit_bytes=_vmem_limit_bytes(
                tb, din, hid, dout, jnp.dtype(compute_dtype).itemsize),
        ),
    )(t_arr, x.astype(jnp.float32), *w_args)
    return out


def odefunc_forward_stages(ts, xs, params, *, tb_max=2048,
                           compute_dtype=jnp.float32):
    """Evaluate the ODEfunc at S independent (t, state) pairs in ONE pallas_call.

    ts: (S,) stage times, xs: (S, B, Din) stage states.  Leading grid axis runs
    over stages; the t values live in SMEM and the weights use constant index
    maps, so launch cost and the per-call weight DMA are amortized over all S
    evaluations (the RK-stage-fusion structural win from the perf review).
    """
    (w0x, _, _), (w1x, _, _) = params
    n_stage, batch, din = xs.shape
    hid = w0x.shape[1]
    dout = w1x.shape[1]

    tb = _pick_batch_tile(batch, tb_max)
    grid = (n_stage, _cdiv(batch, tb))
    const = lambda s, i: (0, 0)

    w_args = _weight_args(params, compute_dtype)

    out = pl.pallas_call(
        _odefunc_multi_kernel,
        out_shape=jax.ShapeDtypeStruct((n_stage, batch, dout), jnp.float32),
        grid=grid,
        in_specs=[
            pl.BlockSpec(memory_space=pltpu.MemorySpace.SMEM),       # all stage t's
            pl.BlockSpec((None, tb, din), lambda s, i: (s, i, 0)),   # x[s] batch tile
        ] + _weight_specs(din, hid, dout, const),
        out_specs=pl.BlockSpec((None, tb, dout), lambda s, i: (s, i, 0)),
        compiler_params=pltpu.CompilerParams(
            dimension_semantics=("parallel", "parallel"),
            vmem_limit_bytes=_vmem_limit_bytes(
                tb, din, hid, dout, jnp.dtype(compute_dtype).itemsize),
        ),
    )(jnp.asarray(ts, jnp.float32), xs.astype(jnp.float32), *w_args)
    return out


def odefunc_reference(t, x, params):
    """Pure-JAX reference mirroring ODEnet(concat, softplus).forward."""
    h = x
    n = len(params)
    for i, (wx, wt, b) in enumerate(params):
        h = h @ wx + t * wt + b
        if i < n - 1:
            h = jax.nn.softplus(h)
    return h


def init_params(key, in_dim, hidden_dim, out_dim):
    """Deterministic synthetic weights for ConcatLinear layers.

    PyTorch ConcatLinear layer i is nn.Linear(dim_in + 1, dim_out); we store the
    transposed weight split into the x-part (dim_in, dim_out) and the time
    column (1, dim_out), plus the bias (1, dim_out).
    """
    dims = [in_dim, hidden_dim, out_dim]
    params = []
    for i in range(len(dims) - 1):
        d_in, d_out = dims[i], dims[i + 1]
        key, k1, k2, k3 = jax.random.split(key, 4)
        scale = 1.0 / jnp.sqrt(d_in + 1.0)
        wx = jax.random.uniform(k1, (d_in, d_out), jnp.float32, -scale, scale)
        wt = jax.random.uniform(k2, (1, d_out), jnp.float32, -scale, scale)
        b = jax.random.uniform(k3, (1, d_out), jnp.float32, -scale, scale)
        params.append((wx, wt, b))
    return tuple(params)


if __name__ == "__main__":
    key = jax.random.PRNGKey(0)
    key, kx, kx2, kxs = jax.random.split(key, 4)

    batch, in_dim, hidden_dim, out_dim = 8, 16, 32, 16
    params = init_params(key, in_dim, hidden_dim, out_dim)
    x = jax.random.normal(kx, (batch, in_dim), jnp.float32)   # states
    t = jnp.float32(0.5)                                      # scalar time

    out = jax.block_until_ready(odefunc_forward(t, x, params))
    ref = odefunc_reference(t, x, params)
    assert out.shape == (batch, out_dim)
    assert jnp.allclose(out, ref, atol=1e-5, rtol=1e-5), "mismatch vs reference"

    # Multi-step pipelined batch grid with a ragged final block (250 % 64 != 0):
    # exercises masked boundary reads/writes with no wrapper-side padding.
    x2 = jax.random.normal(kx2, (250, in_dim), jnp.float32)
    out2 = jax.block_until_ready(odefunc_forward(t, x2, params, tb_max=64))
    ref2 = odefunc_reference(t, x2, params)
    assert out2.shape == (250, out_dim)
    assert jnp.allclose(out2, ref2, atol=1e-5, rtol=1e-5), "mismatch (gridded/ragged)"

    # bf16 MXU operands with f32 accumulation (halves resident-weight VMEM and
    # MXU passes); validate against the f32 reference at a bf16-level tolerance.
    out_bf = jax.block_until_ready(
        odefunc_forward(t, x2, params, tb_max=64, compute_dtype=jnp.bfloat16))
    assert jnp.allclose(out_bf, ref2, atol=5e-2, rtol=5e-2), "mismatch (bf16)"

    # Fused multi-stage evaluation: 4 (t, state) pairs in a single pallas_call.
    n_stages = 4
    ts = jnp.linspace(0.0, 1.0, n_stages, dtype=jnp.float32)
    xs = jax.random.normal(kxs, (n_stages, batch, in_dim), jnp.float32)
    outs = jax.block_until_ready(odefunc_forward_stages(ts, xs, params))
    refs = jnp.stack([odefunc_reference(ts[s], xs[s], params)
                      for s in range(n_stages)])
    assert outs.shape == (n_stages, batch, out_dim)
    assert jnp.allclose(outs, refs, atol=1e-5, rtol=1e-5), "mismatch (staged)"

    print("KERNEL_OK")
</pallas_src>

<mosaic_0001>
module attributes {stable_mosaic.version = 11 : i64} {
  func.func @_odefunc_kernel(%arg0: i32, %arg1: memref<1xf32, #tpu.memory_space<smem>>, %arg2: memref<8x16xf32, #tpu.memory_space<vmem>>, %arg3: memref<16x32xf32, #tpu.memory_space<vmem>>, %arg4: memref<1x32xf32, #tpu.memory_space<vmem>>, %arg5: memref<1x32xf32, #tpu.memory_space<vmem>>, %arg6: memref<32x16xf32, #tpu.memory_space<vmem>>, %arg7: memref<1x16xf32, #tpu.memory_space<vmem>>, %arg8: memref<1x16xf32, #tpu.memory_space<vmem>>, %arg9: memref<8x16xf32, #tpu.memory_space<vmem>>) attributes {dimension_semantics = [#tpu.dimension_semantics<parallel>], iteration_bounds = array<i64: 1>, scalar_prefetch = 0 : i64, scratch_operands = 0 : i64, tpu.core_type = #tpu.core_type<tc>, window_params = [{transform_indices = @transform_0, window_bounds = array<i64: 1>}, {transform_indices = @transform_1, window_bounds = array<i64: 8, 16>}, {pipeline_mode = #tpu.pipeline_mode<synchronous>, transform_indices = @transform_2, window_bounds = array<i64: 16, 32>}, {pipeline_mode = #tpu.pipeline_mode<synchronous>, transform_indices = @transform_3, window_bounds = array<i64: 1, 32>}, {pipeline_mode = #tpu.pipeline_mode<synchronous>, transform_indices = @transform_4, window_bounds = array<i64: 1, 32>}, {pipeline_mode = #tpu.pipeline_mode<synchronous>, transform_indices = @transform_5, window_bounds = array<i64: 32, 16>}, {pipeline_mode = #tpu.pipeline_mode<synchronous>, transform_indices = @transform_6, window_bounds = array<i64: 1, 16>}, {pipeline_mode = #tpu.pipeline_mode<synchronous>, transform_indices = @transform_7, window_bounds = array<i64: 1, 16>}, {transform_indices = @transform_8, window_bounds = array<i64: 8, 16>}]} {
    %c0 = arith.constant 0 : index
    %0 = memref.load %arg1[%c0] : memref<1xf32, #tpu.memory_space<smem>>
    %c0_0 = arith.constant 0 : index
    %c0_1 = arith.constant 0 : index
    %1 = vector.load %arg4[%c0_0, %c0_1] : memref<1x32xf32, #tpu.memory_space<vmem>>, vector<1x32xf32>
    %2 = vector.broadcast %0 : f32 to vector<1x32xf32>
    %3 = arith.mulf %2, %1 : vector<1x32xf32>
    %c0_2 = arith.constant 0 : index
    %c0_3 = arith.constant 0 : index
    %4 = vector.load %arg5[%c0_2, %c0_3] : memref<1x32xf32, #tpu.memory_space<vmem>>, vector<1x32xf32>
    %5 = arith.addf %3, %4 : vector<1x32xf32>
    %c0_4 = arith.constant 0 : index
    %c0_5 = arith.constant 0 : index
    %6 = vector.load %arg7[%c0_4, %c0_5] : memref<1x16xf32, #tpu.memory_space<vmem>>, vector<1x16xf32>
    %7 = vector.broadcast %0 : f32 to vector<1x16xf32>
    %8 = arith.mulf %7, %6 : vector<1x16xf32>
    %c0_6 = arith.constant 0 : index
    %c0_7 = arith.constant 0 : index
    %9 = vector.load %arg8[%c0_6, %c0_7] : memref<1x16xf32, #tpu.memory_space<vmem>>, vector<1x16xf32>
    %10 = arith.addf %8, %9 : vector<1x16xf32>
    %c0_8 = arith.constant 0 : index
    %c0_9 = arith.constant 0 : index
    %11 = vector.load %arg3[%c0_8, %c0_9] : memref<16x32xf32, #tpu.memory_space<vmem>>, vector<16x32xf32>
    %c0_10 = arith.constant 0 : index
    %c0_11 = arith.constant 0 : index
    %12 = vector.load %arg6[%c0_10, %c0_11] : memref<32x16xf32, #tpu.memory_space<vmem>>, vector<32x16xf32>
    %c0_12 = arith.constant 0 : index
    %c0_13 = arith.constant 0 : index
    %13 = vector.load %arg2[%c0_12, %c0_13] : memref<8x16xf32, #tpu.memory_space<vmem>>, vector<8x16xf32>
    %cst = arith.constant dense<0.000000e+00> : vector<8x32xf32>
    %14 = tpu.matmul %13, %11, %cst {dimension_numbers = #tpu.dot_dimension_numbers<[1], [0], [0], [1], [0, 0, 1, 1], [], []>} : vector<8x16xf32>, vector<16x32xf32>, vector<8x32xf32> -> vector<8x32xf32>
    %15 = vector.broadcast %5 : vector<1x32xf32> to vector<8x32xf32>
    %16 = arith.addf %14, %15 : vector<8x32xf32>
    %cst_14 = arith.constant 0.000000e+00 : f32
    %17 = vector.broadcast %cst_14 : f32 to vector<8x32xf32>
    %18 = arith.maximumf %16, %17 : vector<8x32xf32>
    %19 = math.absf %16 : vector<8x32xf32>
    %cst_15 = arith.constant 0.000000e+00 : f32
    %20 = vector.broadcast %cst_15 : f32 to vector<8x32xf32>
    %21 = arith.subf %20, %19 : vector<8x32xf32>
    %22 = math.exp %21 : vector<8x32xf32>
    %23 = math.log1p %22 : vector<8x32xf32>
    %24 = arith.addf %18, %23 : vector<8x32xf32>
    %cst_16 = arith.constant dense<0.000000e+00> : vector<8x16xf32>
    %25 = tpu.matmul %24, %12, %cst_16 {dimension_numbers = #tpu.dot_dimension_numbers<[1], [0], [0], [1], [0, 0, 1, 1], [], []>} : vector<8x32xf32>, vector<32x16xf32>, vector<8x16xf32> -> vector<8x16xf32>
    %26 = vector.broadcast %10 : vector<1x16xf32> to vector<8x16xf32>
    %27 = arith.addf %25, %26 : vector<8x16xf32>
    %c0_17 = arith.constant 0 : index
    %c0_18 = arith.constant 0 : index
    %28 = vector.load %arg9[%c0_17, %c0_18] : memref<8x16xf32, #tpu.memory_space<vmem>>, vector<8x16xf32>
    tpu.vector_store %arg9[%c0_17, %c0_18], %27 {strides = array<i32>} : memref<8x16xf32, #tpu.memory_space<vmem>>, vector<8x16xf32>,
    return
  }
  func.func @transform_0(%arg0: i32) -> i32 {
    %c0_i32 = arith.constant 0 : i32
    %c0_i32_0 = arith.constant 0 : i32
    return %c0_i32 : i32
  }
  func.func @transform_1(%arg0: i32) -> (i32, i32) {
    %c0_i32 = arith.constant 0 : i32
    %c0_i32_0 = arith.constant 0 : i32
    return %arg0, %c0_i32 : i32, i32
  }
  func.func @transform_2(%arg0: i32) -> (i32, i32) {
    %c0_i32 = arith.constant 0 : i32
    %c0_i32_0 = arith.constant 0 : i32
    %c0_i32_1 = arith.constant 0 : i32
    return %c0_i32, %c0_i32_0 : i32, i32
  }
  func.func @transform_3(%arg0: i32) -> (i32, i32) {
    %c0_i32 = arith.constant 0 : i32
    %c0_i32_0 = arith.constant 0 : i32
    %c0_i32_1 = arith.constant 0 : i32
    return %c0_i32, %c0_i32_0 : i32, i32
  }
  func.func @transform_4(%arg0: i32) -> (i32, i32) {
    %c0_i32 = arith.constant 0 : i32
    %c0_i32_0 = arith.constant 0 : i32
    %c0_i32_1 = arith.constant 0 : i32
    return %c0_i32, %c0_i32_0 : i32, i32
  }
  func.func @transform_5(%arg0: i32) -> (i32, i32) {
    %c0_i32 = arith.constant 0 : i32
    %c0_i32_0 = arith.constant 0 : i32
    %c0_i32_1 = arith.constant 0 : i32
    return %c0_i32, %c0_i32_0 : i32, i32
  }
  func.func @transform_6(%arg0: i32) -> (i32, i32) {
    %c0_i32 = arith.constant 0 : i32
    %c0_i32_0 = arith.constant 0 : i32
    %c0_i32_1 = arith.constant 0 : i32
    return %c0_i32, %c0_i32_0 : i32, i32
  }
  func.func @transform_7(%arg0: i32) -> (i32, i32) {
    %c0_i32 = arith.constant 0 : i32
    %c0_i32_0 = arith.constant 0 : i32
    %c0_i32_1 = arith.constant 0 : i32
    return %c0_i32, %c0_i32_0 : i32, i32
  }
  func.func @transform_8(%arg0: i32) -> (i32, i32) {
    %c0_i32 = arith.constant 0 : i32
    %c0_i32_0 = arith.constant 0 : i32
    return %arg0, %c0_i32 : i32, i32
  }
}

</mosaic_0001>

<llo_original>
// kernel: tpu_custom_call.1
$region0: #{tpu_custom_call.1}
  #allocation0 [shape = 'u32[]', space=smem, size = 0x4, offset = 0x4, fixed_abs, tag = 'smem constant byte address 0x4 - core index']
  #allocation1 [shape = 'u32[144,128]{1,0:T(1,128)}', space=vmem, size = 0x12000, scoped, tag = 'internal scratch']
  #allocation2 [shape = 'f32[1]{0:T(128)S(6)}', space=smem, size = 0x200, scoped, tag = 'scoped memory for tpu_custom_call.1']
  %s0 = inlined_call_operand.<no memory space> [shape: f32[1], index: 0, kind: input, shape index: {}]
  %s1 = inlined_call_operand.vmem [shape: f32[8,16], index: 1, kind: input, shape index: {}]
  %s2 = inlined_call_operand.vmem [shape: f32[16,32], index: 2, kind: input, shape index: {}]
  %s3 = inlined_call_operand.vmem [shape: f32[1,32], index: 3, kind: input, shape index: {}]
  %s4 = inlined_call_operand.vmem [shape: f32[1,32], index: 4, kind: input, shape index: {}]
  %s5 = inlined_call_operand.vmem [shape: f32[32,16], index: 5, kind: input, shape index: {}]
  %s6 = inlined_call_operand.vmem [shape: f32[1,16], index: 6, kind: input, shape index: {}]
  %s7 = inlined_call_operand.vmem [shape: f32[1,16], index: 7, kind: input, shape index: {}]
  %s8 = inlined_call_operand.hbm [shape: f32[8,16], index: 8, kind: output, shape index: {}]
  %s9 = sld [smem:[#allocation0]]
  $region42: #{tpu_custom_call.1} parent=0
    _
  %s11 = ssub.s32 1, %s9
  %s12 = scalar_select 0, %s11, %s9
  %13 = sst [smem:[#allocation2]] %s0
  $region1: #{tpu_custom_call.1} parent=0
    #allocation3 [shape = 'u8[4096]{0}', space=vmem, size = 0x1000, scoped, tag = 'output window, operand 0, single buffered']
    #allocation4 [shape = 's32[1]{0}', space=sflag, size = 0x4, scoped, tag = 'scoped memory for tpu_custom_call.1']
    %14 = vsyncpa [#allocation4], 0
    // Predicated region
    $region2: #{tpu_custom_call.1} parent=1 // pred_check
      _
    $region3: #{tpu_custom_call.1} parent=1 // pred_check_branch
      %16 = sbr.rel (0) target = $region5
    $region4: #{tpu_custom_call.1} parent=1 // pred_region
      _
    $region5: #{tpu_custom_call.1} parent=1 // pred_fallthru
      _
    // Predicated region
    $region6: #{tpu_custom_call.1} parent=1 // pred_check
      _
    $region7: #{tpu_custom_call.1} parent=1 // pred_check_branch
      %18 = sbr.rel (0) target = $region9
    $region8: #{tpu_custom_call.1} parent=1 // pred_region
      _
    $region9: #{tpu_custom_call.1} parent=1 // pred_fallthru
      _
    // Predicated region
    $region10: #{tpu_custom_call.1} parent=1 // pred_check
      _
    $region11: #{tpu_custom_call.1} parent=1 // pred_check_branch
      %20 = sbr.rel (0) target = $region13
    $region12: #{tpu_custom_call.1} parent=1 // pred_region
      _
    $region13: #{tpu_custom_call.1} parent=1 // pred_fallthru
      _
    // Predicated region
    $region14: #{tpu_custom_call.1} parent=1 // pred_check
      _
    $region15: #{tpu_custom_call.1} parent=1 // pred_check_branch
      %22 = sbr.rel (0) target = $region17
    $region16: #{tpu_custom_call.1} parent=1 // pred_region
      _
    $region17: #{tpu_custom_call.1} parent=1 // pred_fallthru
      _
    // Predicated region
    $region18: #{tpu_custom_call.1} parent=1 // pred_check
      _
    $region19: #{tpu_custom_call.1} parent=1 // pred_check_branch
      %24 = sbr.rel (0) target = $region21
    $region20: #{tpu_custom_call.1} parent=1 // pred_region
      _
    $region21: #{tpu_custom_call.1} parent=1 // pred_fallthru
      _
    // Predicated region
    $region22: #{tpu_custom_call.1} parent=1 // pred_check
      _
    $region23: #{tpu_custom_call.1} parent=1 // pred_check_branch
      %26 = sbr.rel (0) target = $region25
    $region24: #{tpu_custom_call.1} parent=1 // pred_region
      _
    $region25: #{tpu_custom_call.1} parent=1 // pred_fallthru
      _
    // Predicated region
    $region26: #{tpu_custom_call.1} parent=1 // pred_check
      _
    $region27: #{tpu_custom_call.1} parent=1 // pred_check_branch
      %28 = sbr.rel (0) target = $region29
    $region28: #{tpu_custom_call.1} parent=1 // pred_region
      _
    $region29: #{tpu_custom_call.1} parent=1 // pred_fallthru
      _
    // Predicated region
    $region30: #{tpu_custom_call.1} parent=1 // pred_check
      _
    $region31: #{tpu_custom_call.1} parent=1 // pred_check_branch
      %30 = sbr.rel (0) target = $region33
    $region32: #{tpu_custom_call.1} parent=1 // pred_region
      _
    $region33: #{tpu_custom_call.1} parent=1 // pred_fallthru
      _
    %s31 = sld [smem:[#allocation2]]
    %v32 = vld [vmem:[%s3] sm:$0x1]
    %v33 = vstv %s31
    %v34 = vmul.f32 %v33, %v32
    %v35 = vld [vmem:[%s4] sm:$0x1]
    %v36 = vadd.f32 %v34, %v35
    %v37 = vld [vmem:[%s6] sm:$0x1]
    %v38 = vmul.f32 %v33, %v37
    %v39 = vld [vmem:[%s7] sm:$0x1]
    %v40 = vadd.f32 %v38, %v39
    %v41 = vld [vmem:[%s2] sm:$0xff]
    %v42 = vld [vmem:[%s2 + $0x8] sm:$0xff]
    %v43 = vld [vmem:[%s5] sm:$0xff]
    %v44 = vld [vmem:[%s5 + $0x8] sm:$0xff]
    %v45 = vld [vmem:[%s5 + $0x10] sm:$0xff]
    %v46 = vld [vmem:[%s5 + $0x18] sm:$0xff]
    %v47 = vld [vmem:[%s1] sm:$0xff]
    %v49 = vlaneseq
    %v50 = vshrl.u32 %v49, 7
    %v51 = vsub.s32 0, %v50
    %v52 = vrot.slane %v36, %v51
    %vm54 = vcmask 130048
    %v56 = vsel %vm54, %v47, 0
    %58 = vmatprep.subr.mxu0 0.0
    %59 = vmatpush1.msra.mxu0 0.0
    %60 = vmatprep.subr.mxu0 0.0
    %61 = vmatpush1.msra.mxu0 0.0
    %62 = vmatprep.subr.mxu0 0.0
    %63 = vmatpush1.msra.mxu0 0.0
    %64 = vmatprep.subr.mxu0 0.0
    %65 = vmatpush1.msra.mxu0 0.0
    %66 = vmatprep.subr.mxu0 0.0
    %67 = vmatpush1.msra.mxu0 0.0
    %68 = vmatprep.subr.mxu0 0.0
    %69 = vmatpush1.msra.mxu0 0.0
    %70 = vmatprep.subr.mxu0 0.0
    %71 = vmatpush1.msra.mxu0 0.0
    %72 = vmatprep.subr.mxu0 0.0
    %73 = vmatpush1.msra.mxu0 0.0
    %74 = vmatprep.subr.mxu0 0.0
    %75 = vmatpush1.msra.mxu0 0.0
    %76 = vmatprep.subr.mxu0 0.0
    %77 = vmatpush1.msra.mxu0 0.0
    %78 = vmatprep.subr.mxu0 0.0
    %79 = vmatpush1.msra.mxu0 0.0
    %80 = vmatprep.subr.mxu0 0.0
    %81 = vmatpush1.msra.mxu0 0.0
    %82 = vmatprep.subr.mxu0 0.0
    %83 = vmatpush1.msra.mxu0 0.0
    %84 = vmatprep.subr.mxu0 0.0
    %85 = vmatpush1.msra.mxu0 0.0
    %86 = vmatprep.subr.mxu0 0.0
    %87 = vmatpush1.msra.mxu0 %v42
    %88 = vmatprep.subr.mxu0 0.0
    %89 = vmatpush1.msra.mxu0 %v41
    %90 = vmatprep.subr.mxu0 0.0
    %91 = vmatpush2.msra.mxu0 0.0
    %92 = vmatprep.subr.mxu0 0.0
    %93 = vmatpush2.msra.mxu0 0.0
    %94 = vmatprep.subr.mxu0 0.0
    %95 = vmatpush2.msra.mxu0 0.0
    %96 = vmatprep.subr.mxu0 0.0
    %97 = vmatpush2.msra.mxu0 0.0
    %98 = vmatprep.subr.mxu0 0.0
    %99 = vmatpush2.msra.mxu0 0.0
    %100 = vmatprep.subr.mxu0 0.0
    %101 = vmatpush2.msra.mxu0 0.0
    %102 = vmatprep.subr.mxu0 0.0
    %103 = vmatpush2.msra.mxu0 0.0
    %104 = vmatprep.subr.mxu0 0.0
    %105 = vmatpush2.msra.mxu0 0.0
    %106 = vmatprep.subr.mxu0 0.0
    %107 = vmatpush2.msra.mxu0 0.0
    %108 = vmatprep.subr.mxu0 0.0
    %109 = vmatpush2.msra.mxu0 0.0
    %110 = vmatprep.subr.mxu0 0.0
    %111 = vmatpush2.msra.mxu0 0.0
    %112 = vmatprep.subr.mxu0 0.0
    %113 = vmatpush2.msra.mxu0 0.0
    %114 = vmatprep.subr.mxu0 0.0
    %115 = vmatpush2.msra.mxu0 0.0
    %116 = vmatprep.subr.mxu0 0.0
    %117 = vmatpush2.msra.mxu0 0.0
    %118 = vmatprep.subr.mxu0 0.0
    %119 = vmatpush2.msra.mxu0 0.0
    %120 = vmatprep.subr.mxu0 0.0
    %121 = vmatpush2.msra.mxu0 0.0
    %122 = vmatprep.mubr.f32.mxu0 0.0
    %123 = vmatmul.mubr.f32.gmra.mxu0 %v56
    %v124 = vpop.f32.mrf.mxu0
    %v125 = vadd.f32 %v52, %v124
    %v126 = vpop.f32.mrf.mxu0
    %127 = vdwg.mxu0
    %v128 = vmax.f32 %v125, 0.0
    %v129 = vand.u32 2147483647, %v125
    %v130 = vsub.f32 0.0, %v129
    %v131 = vmul.f32 %v130, 1.442695
    %v132 = vpow.pop %v131
    %v133 = vadd.f32 %v132, 1.0
    %v134 = vlog2.pop %v133
    %v135 = vmul.f32 %v134, 0.6931472
    %v136 = vmul.f32 -0.5, %v132
    %v137 = vadd.f32 %v136, 1.0
    %v138 = vmul.f32 %v137, %v132
    %v139 = vand.u32 2147483647, %v132
    %vm140 = vcmp.lt.f32.partialorder %v139, 0.0004427343
    %v141 = vsel %vm140, %v138, %v135
    %v142 = vadd.f32 %v128, %v141
    %v144 = vlaneseq
    %v145 = vshrl.u32 %v144, 7
    %v146 = vsub.s32 0, %v145
    %v147 = vrot.slane %v40, %v146
    %vm149 = vcmask 261120
    %v151 = vsel %vm149, %v142, 0
    %153 = vmatprep.subr.mxu0 0.0
    %154 = vmatpush1.msra.mxu0 0.0
    %155 = vmatprep.subr.mxu0 0.0
    %156 = vmatpush1.msra.mxu0 0.0
    %157 = vmatprep.subr.mxu0 0.0
    %158 = vmatpush1.msra.mxu0 0.0
    %159 = vmatprep.subr.mxu0 0.0
    %160 = vmatpush1.msra.mxu0 0.0
    %161 = vmatprep.subr.mxu0 0.0
    %162 = vmatpush1.msra.mxu0 0.0
    %163 = vmatprep.subr.mxu0 0.0
    %164 = vmatpush1.msra.mxu0 0.0
    %165 = vmatprep.subr.mxu0 0.0
    %166 = vmatpush1.msra.mxu0 0.0
    %167 = vmatprep.subr.mxu0 0.0
    %168 = vmatpush1.msra.mxu0 0.0
    %169 = vmatprep.subr.mxu0 0.0
    %170 = vmatpush1.msra.mxu0 0.0
    %171 = vmatprep.subr.mxu0 0.0
    %172 = vmatpush1.msra.mxu0 0.0
    %173 = vmatprep.subr.mxu0 0.0
    %174 = vmatpush1.msra.mxu0 0.0
    %175 = vmatprep.subr.mxu0 0.0
    %176 = vmatpush1.msra.mxu0 0.0
    %177 = vmatprep.subr.mxu0 0.0
    %178 = vmatpush1.msra.mxu0 %v46
    %179 = vmatprep.subr.mxu0 0.0
    %180 = vmatpush1.msra.mxu0 %v45
    %181 = vmatprep.subr.mxu0 0.0
    %182 = vmatpush1.msra.mxu0 %v44
    %183 = vmatprep.subr.mxu0 0.0
    %184 = vmatpush1.msra.mxu0 %v43
    %185 = vmatprep.subr.mxu0 0.0
    %186 = vmatpush2.msra.mxu0 0.0
    %187 = vmatprep.subr.mxu0 0.0
    %188 = vmatpush2.msra.mxu0 0.0
    %189 = vmatprep.subr.mxu0 0.0
    %190 = vmatpush2.msra.mxu0 0.0
    %191 = vmatprep.subr.mxu0 0.0
    %192 = vmatpush2.msra.mxu0 0.0
    %193 = vmatprep.subr.mxu0 0.0
    %194 = vmatpush2.msra.mxu0 0.0
    %195 = vmatprep.subr.mxu0 0.0
    %196 = vmatpush2.msra.mxu0 0.0
    %197 = vmatprep.subr.mxu0 0.0
    %198 = vmatpush2.msra.mxu0 0.0
    %199 = vmatprep.subr.mxu0 0.0
    %200 = vmatpush2.msra.mxu0 0.0
    %201 = vmatprep.subr.mxu0 0.0
    %202 = vmatpush2.msra.mxu0 0.0
    %203 = vmatprep.subr.mxu0 0.0
    %204 = vmatpush2.msra.mxu0 0.0
    %205 = vmatprep.subr.mxu0 0.0
    %206 = vmatpush2.msra.mxu0 0.0
    %207 = vmatprep.subr.mxu0 0.0
    %208 = vmatpush2.msra.mxu0 0.0
    %209 = vmatprep.subr.mxu0 0.0
    %210 = vmatpush2.msra.mxu0 0.0
    %211 = vmatprep.subr.mxu0 0.0
    %212 = vmatpush2.msra.mxu0 0.0
    %213 = vmatprep.subr.mxu0 0.0
    %214 = vmatpush2.msra.mxu0 0.0
    %215 = vmatprep.subr.mxu0 0.0
    %216 = vmatpush2.msra.mxu0 0.0
    %217 = vmatprep.mubr.f32.mxu0 0.0
    %218 = vmatmul.mubr.f32.gmra.mxu0 %v151
    %v219 = vpop.f32.mrf.mxu0
    %v220 = vadd.f32 %v147, %v219
    %v221 = vpop.f32.mrf.mxu0
    %222 = vdwg.mxu0
    %223 = vst.msk [vmem:[#allocation3] sm:$0xff] %vm54, %v220
    // Predicated region
    $region34: #{tpu_custom_call.1} parent=1 // pred_check
      _
    $region35: #{tpu_custom_call.1} parent=1 // pred_check_branch
      %225 = sbr.rel (0) target = $region37
    $region36: #{tpu_custom_call.1} parent=1 // pred_region
      %s227 = ssub.s32 128, 128
      %228 = vsyncadd [#allocation4], %s227
      %s230 = sshll.u32 [#allocation3], 4
      %s231 = int_to_ptr.vmem [resolvable:$true] %s230
      %233 = dma.vmem_to_hbm [thread:$0]  %s231, 128, %s8, [#allocation4]
    $region37: #{tpu_custom_call.1} parent=1 // pred_fallthru
      _
    // Predicated region
    $region38: #{tpu_custom_call.1} parent=1 // pred_check
      _
    $region39: #{tpu_custom_call.1} parent=1 // pred_check_branch
      %235 = sbr.rel (0) target = $region41
    $region40: #{tpu_custom_call.1} parent=1 // pred_region
      %236 = dma.done [#allocation4], 128
    $region41: #{tpu_custom_call.1} parent=1 // pred_fallthru
      _
    %237 = vsyncpa [#allocation4], 1

</llo_original>
